<compile_context>
chip_gen: v6e
topology: v6e:2x2x1
jax: 0.10.0
libtpu: 0.0.40
codegen_flags: <defaults>
</compile_context>

<pallas_src>
import jax
import jax.numpy as jnp
from jax.experimental import pallas as pl
from jax.experimental.pallas import tpu as pltpu

LANES = 128                  # vreg lane width
SUBLANES = 8                 # f32 sublane count
MIN_TILE = SUBLANES * LANES  # 1024 elements = one (8, 128) f32 vreg tile
MAX_BLOCK_ROWS = 4096        # (4096, 128) f32 = 2 MiB/block; ~8 MiB live double-buffered
TARGET_BLOCKS = 4            # keep grid >= ~4: pipelining + v7x dual-TC sharding


def _round_up(a, m):
    return -(-a // m) * m


def linear_kernel(p_ref, x_ref, o_ref):
    # p_ref: (1, 2) SMEM holding [[W, b]]; x_ref/o_ref: (block_rows, 128) VMEM tiles.
    o_ref[...] = x_ref[...] * p_ref[0, 0] + p_ref[0, 1]


def linear_regression_forward(x, w, b):
    """x: (N, 1) f32, w: (1, 1) f32, b: (1,) f32 -> (N, 1) f32."""
    n = x.shape[0]
    dtype = x.dtype
    # TODO(synk): row/tile rounding below assumes f32; make it dtype-dependent
    # (bf16 min tile is (16, 128)) if this is ever run in low precision.

    # ---- lane-dense slab: pad only the ragged tail (<= 1023 elems / 4 KiB) ----
    padded_n = max(_round_up(n, MIN_TILE), MIN_TILE)
    x_flat = x.reshape(-1)
    if padded_n != n:
        x_flat = jnp.pad(x_flat, (0, padded_n - n))
    rows = padded_n // LANES                       # multiple of 8
    x_slab = x_flat.reshape(rows, LANES)

    # ---- block choice: big blocks, but keep several grid steps alive ----
    block_rows = _round_up(pl.cdiv(rows, TARGET_BLOCKS), SUBLANES)
    block_rows = max(SUBLANES, min(MAX_BLOCK_ROWS, min(block_rows, rows)))
    grid = (pl.cdiv(rows, block_rows),)            # partial last block is masked

    # W and b as one (1, 2) SMEM scalar pair.
    params = jnp.concatenate([w.reshape(1), b.reshape(1)]).reshape(1, 2).astype(jnp.float32)

    y_slab = pl.pallas_call(
        linear_kernel,
        out_shape=jax.ShapeDtypeStruct((rows, LANES), dtype),
        grid=grid,
        in_specs=[
            pl.BlockSpec(memory_space=pltpu.MemorySpace.SMEM),        # [[W, b]]
            pl.BlockSpec((block_rows, LANES), lambda i: (i, 0)),      # x tile (VMEM)
        ],
        out_specs=pl.BlockSpec((block_rows, LANES), lambda i: (i, 0)),
        compiler_params=pltpu.CompilerParams(
            dimension_semantics=("parallel",),
        ),
    )(params, x_slab)

    # ---- restore (N, 1); free reshape when no padding was added ----
    y_flat = y_slab.reshape(-1)
    if padded_n != n:
        y_flat = y_flat[:n]
    return y_flat.reshape(n, 1)


if __name__ == "__main__":
    key = jax.random.PRNGKey(0)
    kx, kw, kb = jax.random.split(key, 3)

    # Parameters with the same shapes as nn.Linear(1, 1).
    w = jax.random.uniform(kw, (1, 1), dtype=jnp.float32, minval=-1.0, maxval=1.0)
    b = jax.random.uniform(kb, (1,), dtype=jnp.float32, minval=-1.0, maxval=1.0)

    # Example input: batch of 8 samples, 1 feature each (matches forward(x)).
    x = jax.random.normal(kx, (8, 1), dtype=jnp.float32)

    y = linear_regression_forward(x, w, b)
    y = jax.block_until_ready(y)

    # Reference check (same semantics as torch.nn.Linear(1, 1)).
    y_ref = x @ w.T + b
    assert y.shape == (8, 1)
    assert jnp.allclose(y, y_ref, atol=1e-6, rtol=1e-6)

    print("KERNEL_OK")
</pallas_src>

<mosaic_0001>
module attributes {stable_mosaic.version = 11 : i64} {
  func.func @linear_kernel(%arg0: i32, %arg1: memref<1x2xf32, #tpu.memory_space<smem>>, %arg2: memref<8x128xf32, #tpu.memory_space<vmem>>, %arg3: memref<8x128xf32, #tpu.memory_space<vmem>>) attributes {dimension_semantics = [#tpu.dimension_semantics<parallel>], iteration_bounds = array<i64: 1>, scalar_prefetch = 0 : i64, scratch_operands = 0 : i64, tpu.core_type = #tpu.core_type<tc>, window_params = [{transform_indices = @transform_0, window_bounds = array<i64: 1, 2>}, {transform_indices = @transform_1, window_bounds = array<i64: 8, 128>}, {transform_indices = @transform_2, window_bounds = array<i64: 8, 128>}]} {
    %c0 = arith.constant 0 : index
    %c0_0 = arith.constant 0 : index
    %0 = vector.load %arg2[%c0, %c0_0] : memref<8x128xf32, #tpu.memory_space<vmem>>, vector<8x128xf32>
    %c0_1 = arith.constant 0 : index
    %c0_2 = arith.constant 0 : index
    %1 = memref.load %arg1[%c0_1, %c0_2] : memref<1x2xf32, #tpu.memory_space<smem>>
    %2 = vector.broadcast %1 : f32 to vector<8x128xf32>
    %3 = arith.mulf %0, %2 : vector<8x128xf32>
    %c0_3 = arith.constant 0 : index
    %c1 = arith.constant 1 : index
    %4 = memref.load %arg1[%c0_3, %c1] : memref<1x2xf32, #tpu.memory_space<smem>>
    %5 = vector.broadcast %4 : f32 to vector<8x128xf32>
    %6 = arith.addf %3, %5 : vector<8x128xf32>
    %c0_4 = arith.constant 0 : index
    %c0_5 = arith.constant 0 : index
    %7 = vector.load %arg3[%c0_4, %c0_5] : memref<8x128xf32, #tpu.memory_space<vmem>>, vector<8x128xf32>
    tpu.vector_store %arg3[%c0_4, %c0_5], %6 {strides = array<i32>} : memref<8x128xf32, #tpu.memory_space<vmem>>, vector<8x128xf32>,
    return
  }
  func.func @transform_0(%arg0: i32) -> (i32, i32) {
    %c0_i32 = arith.constant 0 : i32
    %c0_i32_0 = arith.constant 0 : i32
    %c0_i32_1 = arith.constant 0 : i32
    return %c0_i32, %c0_i32_0 : i32, i32
  }
  func.func @transform_1(%arg0: i32) -> (i32, i32) {
    %c0_i32 = arith.constant 0 : i32
    %c0_i32_0 = arith.constant 0 : i32
    return %arg0, %c0_i32 : i32, i32
  }
  func.func @transform_2(%arg0: i32) -> (i32, i32) {
    %c0_i32 = arith.constant 0 : i32
    %c0_i32_0 = arith.constant 0 : i32
    return %arg0, %c0_i32 : i32, i32
  }
}

</mosaic_0001>

<llo_original>
// kernel: tpu_custom_call.1
$region0: #{tpu_custom_call.1}
  #allocation0 [shape = 'u32[]', space=smem, size = 0x4, offset = 0x4, fixed_abs, tag = 'smem constant byte address 0x4 - core index']
  #allocation1 [shape = 'u32[144,128]{1,0:T(1,128)}', space=vmem, size = 0x12000, scoped, tag = 'internal scratch']
  %s0 = inlined_call_operand.hbm [shape: f32[1,2], index: 0, kind: input, shape index: {}]
  %s1 = inlined_call_operand.hbm [shape: f32[8,128], index: 1, kind: input, shape index: {}]
  %s2 = inlined_call_operand.hbm [shape: f32[8,128], index: 2, kind: output, shape index: {}]
  %s3 = sld [smem:[#allocation0]]
  $region26: #{tpu_custom_call.1} parent=0
    _
  %s5 = ssub.s32 1, %s3
  %s6 = scalar_select 0, %s5, %s3
  $region1: #{tpu_custom_call.1} parent=0
    #allocation2 [shape = 'u8[512]{0}', space=smem, size = 0x200, scoped, tag = 'input window, operand 0, single buffered']
    #allocation3 [shape = 's32[1]{0}', space=sflag, size = 0x4, scoped, tag = 'scoped memory for tpu_custom_call.1']
    #allocation4 [shape = 's32[1]{0}', space=sflag, size = 0x4, scoped, tag = 'scoped memory for tpu_custom_call.1']
    #allocation5 [shape = 's32[1]{0}', space=sflag, size = 0x4, scoped, tag = 'scoped memory for tpu_custom_call.1']
    #allocation6 [shape = 'u8[4096]{0}', space=vmem, size = 0x1000, scoped, tag = 'input window, operand 1, single buffered']
    #allocation7 [shape = 'u8[4096]{0}', space=vmem, size = 0x1000, scoped, tag = 'output window, operand 0, single buffered']
    %7 = vsyncpa [#allocation5], 0
    %8 = vsyncpa [#allocation3], 0
    %9 = vsyncpa [#allocation4], 0
    // Predicated region
    $region2: #{tpu_custom_call.1} parent=1 // pred_check
      _
    $region3: #{tpu_custom_call.1} parent=1 // pred_check_branch
      %11 = sbr.rel (0) target = $region5
    $region4: #{tpu_custom_call.1} parent=1 // pred_region
      %s13 = ssub.s32 16, 16
      %14 = vsyncadd [#allocation5], %s13
      %17 = dma.hbm_to_smem %s0, 16, [#allocation2], [#allocation5]
    $region5: #{tpu_custom_call.1} parent=1 // pred_fallthru
      _
    // Predicated region
    $region6: #{tpu_custom_call.1} parent=1 // pred_check
      _
    $region7: #{tpu_custom_call.1} parent=1 // pred_check_branch
      %19 = sbr.rel (0) target = $region9
    $region8: #{tpu_custom_call.1} parent=1 // pred_region
      %s21 = ssub.s32 128, 128
      %22 = vsyncadd [#allocation3], %s21
      %s24 = sshll.u32 [#allocation6], 4
      %s25 = int_to_ptr.vmem [resolvable:$true] %s24
      %27 = dma.hbm_to_vmem [thread:$0]  %s1, 128, %s25, [#allocation3]
    $region9: #{tpu_custom_call.1} parent=1 // pred_fallthru
      _
    // Predicated region
    $region10: #{tpu_custom_call.1} parent=1 // pred_check
      _
    $region11: #{tpu_custom_call.1} parent=1 // pred_check_branch
      %29 = sbr.rel (0) target = $region13
    $region12: #{tpu_custom_call.1} parent=1 // pred_region
      %30 = dma.done [#allocation5], 16
    $region13: #{tpu_custom_call.1} parent=1 // pred_fallthru
      _
    // Predicated region
    $region14: #{tpu_custom_call.1} parent=1 // pred_check
      _
    $region15: #{tpu_custom_call.1} parent=1 // pred_check_branch
      %32 = sbr.rel (0) target = $region17
    $region16: #{tpu_custom_call.1} parent=1 // pred_region
      %33 = dma.done [#allocation3], 128
    $region17: #{tpu_custom_call.1} parent=1 // pred_fallthru
      _
    %34 = sfence
    %v35 = vld [vmem:[#allocation6] sm:$0xff]
    %s36 = sld [smem:[#allocation2]]
    %v37 = vstv %s36
    %v38 = vmul.f32 %v35, %v37
    %s39 = sld [smem:[#allocation2 + $0x1]]
    %v40 = vstv %s39
    %v41 = vadd.f32 %v38, %v40
    %42 = vst [vmem:[#allocation7] sm:$0xff] %v41
    // Predicated region
    $region18: #{tpu_custom_call.1} parent=1 // pred_check
      _
    $region19: #{tpu_custom_call.1} parent=1 // pred_check_branch
      %44 = sbr.rel (0) target = $region21
    $region20: #{tpu_custom_call.1} parent=1 // pred_region
      %s46 = ssub.s32 128, 128
      %47 = vsyncadd [#allocation4], %s46
      %s49 = sshll.u32 [#allocation7], 4
      %s50 = int_to_ptr.vmem [resolvable:$true] %s49
      %52 = dma.vmem_to_hbm [thread:$0]  %s50, 128, %s2, [#allocation4]
    $region21: #{tpu_custom_call.1} parent=1 // pred_fallthru
      _
    // Predicated region
    $region22: #{tpu_custom_call.1} parent=1 // pred_check
      _
    $region23: #{tpu_custom_call.1} parent=1 // pred_check_branch
      %54 = sbr.rel (0) target = $region25
    $region24: #{tpu_custom_call.1} parent=1 // pred_region
      %55 = dma.done [#allocation4], 128
    $region25: #{tpu_custom_call.1} parent=1 // pred_fallthru
      _
    %56 = vsyncpa [#allocation3], 1
    %57 = vsyncpa [#allocation4], 1
    %58 = vsyncpa [#allocation5], 1

</llo_original>
